<compile_context>
chip_gen: v5e
topology: v5e:2x2
jax: 0.10.0
libtpu: 0.0.40
codegen_flags: <defaults>
</compile_context>

<pallas_src>
import jax
import jax.numpy as jnp
import numpy as np
from jax.experimental import pallas as pl
from jax.experimental.pallas import tpu as pltpu

_LANE = 128
_VMEM_BUDGET = 32 * 1024 * 1024   # per-step working-set target (safe on v5e/v6e/v7x)
_VMEM_LIMIT = 48 * 1024 * 1024    # scoped-VMEM limit handed to Mosaic (< 64 MiB v7x)


def _round_up(x, m):
    return ((x + m - 1) // m) * m


def _sublane(dtype):
    # Minimum sublane tile for the dtype's packing: 8 (f32), 16 (bf16), 32 (int8/fp8).
    return max(8, 32 // jnp.dtype(dtype).itemsize)


def _largest_dividing_multiple(total, cap, step):
    """Largest multiple of `step` that divides `total` and is <= cap (fallback: step)."""
    cap = min(cap, total)
    cap = (cap // step) * step
    for cand in range(cap, step - 1, -step):
        if total % cand == 0:
            return cand
    return step


# ---------------------------------------------------------------------------
# Kernels
# ---------------------------------------------------------------------------

def _linear_kernel_acc(x_ref, w_ref, b_ref, o_ref, acc_ref):
    # x_ref: [tm, tk], w_ref: [tk, tn], b_ref: [1, tn] f32,
    # o_ref: [tm, tn], acc_ref: [tm, tn] f32 scratch (resident across K).
    k = pl.program_id(2)

    @pl.when(k == 0)
    def _():
        acc_ref[...] = jnp.zeros_like(acc_ref)

    acc_ref[...] += jnp.dot(
        x_ref[...], w_ref[...], preferred_element_type=jnp.float32
    )

    @pl.when(k == pl.num_programs(2) - 1)
    def _():
        o_ref[...] = (acc_ref[...] + b_ref[...]).astype(o_ref.dtype)


def _linear_kernel_single(x_ref, w_ref, b_ref, o_ref):
    # Whole K fits in one step: no scratch, no branches, direct store.
    o_ref[...] = (
        jnp.dot(x_ref[...], w_ref[...], preferred_element_type=jnp.float32)
        + b_ref[...]
    ).astype(o_ref.dtype)


# ---------------------------------------------------------------------------
# Tile selection
# ---------------------------------------------------------------------------

def _select_tiles(M, K, N, in_dtype, out_dtype, tm, tn, tk):
    s = _sublane(in_dtype)
    in_b = jnp.dtype(in_dtype).itemsize
    out_b = jnp.dtype(out_dtype).itemsize

    M_al = _round_up(M, s)
    K_al = _round_up(K, _LANE)
    N_al = _round_up(N, _LANE)

    # M tile: aligned to the dtype's sublane packing; no extra M padding when M small.
    tm = _round_up(max(s, tm), s)
    if M_al <= tm:
        tm = M_al

    # K tile: prefer a divisor of the aligned K so x needs no extra K padding.
    tk = _round_up(max(_LANE, tk), _LANE)
    if K_al <= tk:
        tk = K_al
    else:
        cand = _largest_dividing_multiple(K_al, tk, _LANE)
        if cand >= max(256, tk // 4):
            tk = cand  # divides K_al -> no K padding beyond 128-alignment

    # N tile (lane-dense output): prefer a divisor of the aligned N.
    tn = _round_up(max(_LANE, tn), _LANE)
    if N_al <= tn:
        tn = N_al
    else:
        cand = _largest_dividing_multiple(N_al, tn, _LANE)
        if cand >= max(256, tn // 2):
            tn = cand

    M_pad = _round_up(M, tm)
    N_pad = _round_up(N, tn)

    # Megacore: make sure there are >= 2 parallel output blocks (v7x has 2 TCs).
    if (M_pad // tm) * (N_pad // tn) < 2:
        if tn > _LANE:
            tn = _largest_dividing_multiple(N_pad, tn // 2, _LANE)
        elif tm > s:
            tm = _largest_dividing_multiple(M_pad, max(s, tm // 2), s)

    # Keep the double-buffered working set inside a conservative VMEM budget.
    def footprint(tm_, tn_, tk_):
        k_steps = _round_up(K, tk_) // tk_
        f = 2 * (tm_ * tk_ + tk_ * tn_) * in_b     # double-buffered x / wT panels
        f += 2 * tn_ * 4                           # bias (f32)
        f += 2 * tm_ * tn_ * out_b                 # double-buffered output tile
        if k_steps > 1:
            f += tm_ * tn_ * 4                     # f32 accumulator scratch
        return f

    while footprint(tm, tn, tk) > _VMEM_BUDGET:
        if tk > 256:
            tk = max(256, (tk // 2) // _LANE * _LANE)
        elif tn > 256:
            tn = max(256, (tn // 2) // _LANE * _LANE)
        elif tm > s:
            tm = max(s, (tm // 2) // s * s)
        else:
            break

    M_pad = _round_up(M, tm)
    K_pad = _round_up(K, tk)
    N_pad = _round_up(N, tn)
    return tm, tn, tk, M_pad, K_pad, N_pad


# ---------------------------------------------------------------------------
# Wrapper
# ---------------------------------------------------------------------------

def prepare_linear_weight(weight, dtype=jnp.float32):
    """Pre-transpose (and cast) a PyTorch-layout [out, in] weight to [in, out].

    Do this ONCE at parameter-setup time and pass the result to linear_pallas
    with weight_is_transposed=True, so the forward pass does not pay a K x N
    HBM transpose copy on every call.
    """
    return weight.astype(dtype).T


def linear_pallas(x, weight, bias=None, *, weight_is_transposed=False,
                  tm=512, tn=1024, tk=1024):
    """y = x @ weight.T + bias, as a tiled Pallas TPU GEMM.

    x:      [..., in_features]
    weight: [out_features, in_features]               (weight_is_transposed=False)
            or pre-transposed [in_features, out_features] (weight_is_transposed=True)
    bias:   [out_features] or None
    """
    lead_shape = x.shape[:-1]
    K = x.shape[-1]
    M = int(np.prod(lead_shape)) if lead_shape else 1

    if weight_is_transposed:
        assert weight.shape[0] == K, "prepared weight must be [in_features, out_features]"
        N = weight.shape[1]
        wT = weight.astype(x.dtype)
    else:
        N, K_w = weight.shape
        assert K_w == K
        # NOTE: materializes a K x N transposed copy in HBM every call.
        # Prefer prepare_linear_weight() + weight_is_transposed=True.
        wT = weight.astype(x.dtype).T

    if bias is None:
        b2d = jnp.zeros((1, N), jnp.float32)
    else:
        b2d = bias.astype(jnp.float32).reshape(1, N)

    x2d = x.reshape(M, K)
    out_dtype = x.dtype

    tm, tn, tk, M_pad, K_pad, N_pad = _select_tiles(
        M, K, N, x.dtype, out_dtype, tm, tn, tk)

    # Pad only when the chosen tiles demand it (zeros are exact for the matmul;
    # padded rows/cols are sliced away below).
    if (M_pad, K_pad) != (M, K):
        x2d = jnp.pad(x2d, ((0, M_pad - M), (0, K_pad - K)))
    if (K_pad, N_pad) != (K, N):
        wT = jnp.pad(wT, ((0, K_pad - K), (0, N_pad - N)))
    if N_pad != N:
        b2d = jnp.pad(b2d, ((0, 0), (0, N_pad - N)))

    gm, gn, gk = M_pad // tm, N_pad // tn, K_pad // tk

    if gk == 1:
        out2d = pl.pallas_call(
            _linear_kernel_single,
            out_shape=jax.ShapeDtypeStruct((M_pad, N_pad), out_dtype),
            grid_spec=pltpu.PrefetchScalarGridSpec(
                num_scalar_prefetch=0,
                grid=(gm, gn),
                in_specs=[
                    pl.BlockSpec((tm, K_pad), lambda i, j: (i, 0)),   # x tile
                    pl.BlockSpec((K_pad, tn), lambda i, j: (0, j)),   # wT tile
                    pl.BlockSpec((1, tn), lambda i, j: (0, j)),       # bias tile
                ],
                out_specs=pl.BlockSpec((tm, tn), lambda i, j: (i, j)),
            ),
            compiler_params=pltpu.CompilerParams(
                dimension_semantics=("parallel", "parallel"),
                vmem_limit_bytes=_VMEM_LIMIT,
            ),
        )(x2d, wT, b2d)
    else:
        out2d = pl.pallas_call(
            _linear_kernel_acc,
            out_shape=jax.ShapeDtypeStruct((M_pad, N_pad), out_dtype),
            grid_spec=pltpu.PrefetchScalarGridSpec(
                num_scalar_prefetch=0,
                grid=(gm, gn, gk),
                in_specs=[
                    pl.BlockSpec((tm, tk), lambda i, j, k: (i, k)),   # x tile
                    pl.BlockSpec((tk, tn), lambda i, j, k: (k, j)),   # wT tile
                    pl.BlockSpec((1, tn), lambda i, j, k: (0, j)),    # bias tile
                ],
                out_specs=pl.BlockSpec((tm, tn), lambda i, j, k: (i, j)),
                scratch_shapes=[pltpu.VMEM((tm, tn), jnp.float32)],
            ),
            compiler_params=pltpu.CompilerParams(
                dimension_semantics=("parallel", "parallel", "arbitrary"),
                vmem_limit_bytes=_VMEM_LIMIT,
            ),
        )(x2d, wT, b2d)

    out2d = out2d[:M, :N]
    return out2d.reshape(*lead_shape, N)


def init_linear_params(key, in_features, out_features, init_weight=1.0, init_bias=0.0):
    """Deterministic kaiming_normal init matching the PyTorch module defaults."""
    kw, kb = jax.random.split(key)
    weight = (np.sqrt(1.0 / in_features)
              * jax.random.normal(kw, (out_features, in_features), jnp.float32)
              ) * init_weight
    bias = (np.sqrt(1.0 / in_features)
            * jax.random.normal(kb, (out_features,), jnp.float32)
            ) * init_bias
    return weight, bias


if __name__ == "__main__":
    key = jax.random.PRNGKey(0)
    k_x, k_p, k_x2, k_p2 = jax.random.split(key, 4)

    # Small shapes consistent with the module's usage.
    batch, seq, in_features, out_features = 2, 8, 32, 64
    x = jax.random.normal(k_x, (batch, seq, in_features), jnp.float32)
    weight, bias = init_linear_params(k_p, in_features, out_features, init_bias=0.1)

    # Hoist the weight transpose out of the per-call path (done once here).
    wT = prepare_linear_weight(weight, x.dtype)
    y = linear_pallas(x, wT, bias, weight_is_transposed=True)
    y = jax.block_until_ready(y)

    y_ref = np.asarray(x) @ np.asarray(weight).T + np.asarray(bias)
    np.testing.assert_allclose(np.asarray(y), y_ref, rtol=1e-2, atol=1e-2)

    # Second check: exercise the multi-step K (accumulator) path and the
    # non-prepared-weight path with a forced small K tile.
    in2, out2 = 384, 256
    x2 = jax.random.normal(k_x2, (batch, seq, in2), jnp.float32)
    w2, b2 = init_linear_params(k_p2, in2, out2, init_bias=0.1)
    y2 = linear_pallas(x2, w2, b2, tk=128)
    y2 = jax.block_until_ready(y2)
    y2_ref = np.asarray(x2) @ np.asarray(w2).T + np.asarray(b2)
    np.testing.assert_allclose(np.asarray(y2), y2_ref, rtol=1e-2, atol=1e-2)

    print("KERNEL_OK")
</pallas_src>

<mosaic_0001>
module attributes {stable_mosaic.version = 11 : i64} {
  func.func @_linear_kernel_single(%arg0: i32, %arg1: i32, %arg2: memref<8x128xf32, #tpu.memory_space<vmem>>, %arg3: memref<128x128xf32, #tpu.memory_space<vmem>>, %arg4: memref<1x128xf32, #tpu.memory_space<vmem>>, %arg5: memref<8x128xf32, #tpu.memory_space<vmem>>) attributes {dimension_semantics = [#tpu.dimension_semantics<parallel>, #tpu.dimension_semantics<parallel>], iteration_bounds = array<i64: 2, 1>, scalar_prefetch = 0 : i64, scratch_operands = 0 : i64, tpu.core_type = #tpu.core_type<tc>, window_params = [{transform_indices = @transform_0, window_bounds = array<i64: 8, 128>}, {transform_indices = @transform_1, window_bounds = array<i64: 128, 128>}, {transform_indices = @transform_2, window_bounds = array<i64: 1, 128>}, {transform_indices = @transform_3, window_bounds = array<i64: 8, 128>}]} {
    %c0 = arith.constant 0 : index
    %c0_0 = arith.constant 0 : index
    %0 = vector.load %arg2[%c0, %c0_0] : memref<8x128xf32, #tpu.memory_space<vmem>>, vector<8x128xf32>
    %c0_1 = arith.constant 0 : index
    %c0_2 = arith.constant 0 : index
    %1 = vector.load %arg3[%c0_1, %c0_2] : memref<128x128xf32, #tpu.memory_space<vmem>>, vector<128x128xf32>
    %cst = arith.constant dense<0.000000e+00> : vector<8x128xf32>
    %2 = tpu.matmul %0, %1, %cst {dimension_numbers = #tpu.dot_dimension_numbers<[1], [0], [0], [1], [0, 0, 1, 1], [], []>} : vector<8x128xf32>, vector<128x128xf32>, vector<8x128xf32> -> vector<8x128xf32>
    %c0_3 = arith.constant 0 : index
    %c0_4 = arith.constant 0 : index
    %3 = vector.load %arg4[%c0_3, %c0_4] : memref<1x128xf32, #tpu.memory_space<vmem>>, vector<1x128xf32>
    %4 = vector.broadcast %3 : vector<1x128xf32> to vector<8x128xf32>
    %5 = arith.addf %2, %4 : vector<8x128xf32>
    %c0_5 = arith.constant 0 : index
    %c0_6 = arith.constant 0 : index
    %6 = vector.load %arg5[%c0_5, %c0_6] : memref<8x128xf32, #tpu.memory_space<vmem>>, vector<8x128xf32>
    tpu.vector_store %arg5[%c0_5, %c0_6], %5 {strides = array<i32>} : memref<8x128xf32, #tpu.memory_space<vmem>>, vector<8x128xf32>,
    return
  }
  func.func @transform_0(%arg0: i32, %arg1: i32) -> (i32, i32) {
    %c0_i32 = arith.constant 0 : i32
    %c0_i32_0 = arith.constant 0 : i32
    return %arg0, %c0_i32 : i32, i32
  }
  func.func @transform_1(%arg0: i32, %arg1: i32) -> (i32, i32) {
    %c0_i32 = arith.constant 0 : i32
    %c0_i32_0 = arith.constant 0 : i32
    return %c0_i32, %arg1 : i32, i32
  }
  func.func @transform_2(%arg0: i32, %arg1: i32) -> (i32, i32) {
    %c0_i32 = arith.constant 0 : i32
    %c0_i32_0 = arith.constant 0 : i32
    return %c0_i32, %arg1 : i32, i32
  }
  func.func @transform_3(%arg0: i32, %arg1: i32) -> (i32, i32) {
    %c0_i32 = arith.constant 0 : i32
    return %arg0, %arg1 : i32, i32
  }
}

</mosaic_0001>

<llo_original>
// kernel: tpu_custom_call.1
$region0: #{tpu_custom_call.1}
  #allocation0 [shape = 'u32[]', space=smem, size = 0x4, offset = 0x4, fixed_abs, tag = 'smem constant byte address 0x4 - core index']
  #allocation1 [shape = 'u32[72,128]{1,0:T(1,128)}', space=vmem, size = 0x9000, scoped, tag = 'internal scratch']
  %s0 = inlined_call_operand.hbm [shape: f32[16,128], index: 0, kind: input, shape index: {}]
  %s1 = inlined_call_operand.hbm [shape: f32[128,128], index: 1, kind: input, shape index: {}]
  %s2 = inlined_call_operand.vmem [shape: f32[1,128], index: 2, kind: input, shape index: {}]
  %s3 = inlined_call_operand.hbm [shape: f32[16,128], index: 3, kind: output, shape index: {}]
  %s4 = sld [smem:[#allocation0]]
  $region53: #{tpu_custom_call.1} parent=0
    _
  %s6 = ssub.s32 1, %s4
  %s7 = scalar_select 0, %s6, %s4
  $region1: #{tpu_custom_call.1} parent=0
    #allocation2 [shape = 'u8[8192]{0}', space=vmem, size = 0x2000, scoped, tag = 'input window, operand 0']
    #allocation3 [shape = 's32[2]{0}', space=sflag, size = 0x8, scoped, tag = 'scoped memory for tpu_custom_call.1']
    #allocation4 [shape = 's32[2]{0}', space=sflag, size = 0x8, scoped, tag = 'scoped memory for tpu_custom_call.1']
    #allocation5 [shape = 'u8[65536]{0}', space=vmem, size = 0x10000, scoped, tag = 'input window, operand 1, single buffered']
    #allocation6 [shape = 's32[1]{0}', space=sflag, size = 0x4, scoped, tag = 'scoped memory for tpu_custom_call.1']
    #allocation7 [shape = 'u8[8192]{0}', space=vmem, size = 0x2000, scoped, tag = 'output window, operand 0']
    %8 = vsyncpa [#allocation3], 0
    %s9 = scalar_lea.sflag [#allocation3], 1
    %10 = vsyncpa %s9, 0
    %11 = vsyncpa [#allocation6], 0
    %12 = vsyncpa [#allocation4], 0
    %s13 = scalar_lea.sflag [#allocation4], 1
    %14 = vsyncpa %s13, 0
    loop: start=0, step=1, limit=4
    $region2: #{tpu_custom_call.1} parent=1 // loop_pre_header
      _
    $region3: #{tpu_custom_call.1} parent=1 // loop_header
      %s16 = sphi 0, %s20
      %p17 = scmp.ge.s32.totalorder %s16, 4
      %s23 = sphi 0, %s35
      %s24 = sphi 0, %s31
      %s25 = sphi 0, %s23
      %s26 = sphi 0, %s24
      %s27 = sphi 0, %s25
      %s28 = sphi 0, %s26
      %s38 = sphi 0, %s40
      %s41 = sphi 0, %s38
      %s42 = sphi 0, %s41
      %s58 = sphi 0, %s42
      %s64 = sphi 0, %s66
      %s67 = sphi 0, %s64
      %s68 = sphi 0, %s67
      %s84 = sphi 0, %s68
      %s90 = sphi 0, %s92
      %s93 = sphi 0, %s90
      %s94 = sphi 0, %s93
      %s110 = sphi 0, %s94
      %s118 = sphi 0, %s120
      %s121 = sphi 0, %s118
      %s122 = sphi 0, %s121
      %s138 = sphi 0, %s122
    $region4: #{tpu_custom_call.1} parent=1 // loop_header_branch
      %19 = sbr.rel (%p17) target = $region8
    $region5: #{tpu_custom_call.1} parent=1 // loop_body
      %s21 = ssub.s32 %s16, 1
      %s22 = ssub.s32 %s16, 2
      %s29 = sadd.s32 1, %s24
      %p30 = scmp.ge.s32.totalorder %s29, 1
      %s31 = scalar_select %p30, 0, %s29
      %s32 = sadd.s32 1, %s23
      %s33 = scalar_select %p30, %s32, %s23
      %p34 = scmp.ge.s32.totalorder %s33, 2
      %s35 = scalar_select %p34, 0, %s33
      %s36 = ssub.s32 %s23, %s35
      %p37 = scmp.eq.s32.totalorder %s36, 0
      %s39 = sadd.s32 %s38, 1
      %s40 = scalar_select %p37, %s38, %s39
      %p43 = pneg %p37
      %p44 = scmp.eq.s32.totalorder %s16, 1
      %p45 = por %p43, %p44
      %p46 = scmp.ne.s32.totalorder %s38, %s41
      %p47 = scmp.eq.s32.totalorder %s16, 0
      %p48 = por %p46, %p47
      %p49 = scmp.ne.s32.totalorder %s38, %s41
      %p50 = scmp.eq.s32.totalorder %s21, 1
      %p51 = por %p49, %p50
      %p52 = scmp.ne.s32.totalorder %s41, %s42
      %p53 = scmp.eq.s32.totalorder %s21, 0
      %p54 = por %p52, %p53
      %p55 = scmp.ne.s32.totalorder %s41, %s42
      %p56 = scmp.eq.s32.totalorder %s22, 1
      %p57 = por %p55, %p56
      %p59 = scmp.ne.s32.totalorder %s42, %s58
      %p60 = scmp.eq.s32.totalorder %s22, 0
      %p61 = por %p59, %p60
      %s62 = ssub.s32 %s24, %s31
      %p63 = scmp.eq.s32.totalorder %s62, 0
      %s65 = sadd.s32 %s64, 1
      %s66 = scalar_select %p63, %s64, %s65
      %p69 = pneg %p63
      %p70 = scmp.eq.s32.totalorder %s16, 1
      %p71 = por %p69, %p70
      %p72 = scmp.ne.s32.totalorder %s64, %s67
      %p73 = scmp.eq.s32.totalorder %s16, 0
      %p74 = por %p72, %p73
      %p75 = scmp.ne.s32.totalorder %s64, %s67
      %p76 = scmp.eq.s32.totalorder %s21, 1
      %p77 = por %p75, %p76
      %p78 = scmp.ne.s32.totalorder %s67, %s68
      %p79 = scmp.eq.s32.totalorder %s21, 0
      %p80 = por %p78, %p79
      %p81 = scmp.ne.s32.totalorder %s67, %s68
      %p82 = scmp.eq.s32.totalorder %s22, 1
      %p83 = por %p81, %p82
      %p85 = scmp.ne.s32.totalorder %s68, %s84
      %p86 = scmp.eq.s32.totalorder %s22, 0
      %p87 = por %p85, %p86
      %s88 = ssub.s32 %s24, %s31
      %p89 = scmp.eq.s32.totalorder %s88, 0
      %s91 = sadd.s32 %s90, 1
      %s92 = scalar_select %p89, %s90, %s91
      %p95 = pneg %p89
      %p96 = scmp.eq.s32.totalorder %s16, 1
      %p97 = por %p95, %p96
      %p98 = scmp.ne.s32.totalorder %s90, %s93
      %p99 = scmp.eq.s32.totalorder %s16, 0
      %p100 = por %p98, %p99
      %p101 = scmp.ne.s32.totalorder %s90, %s93
      %p102 = scmp.eq.s32.totalorder %s21, 1
      %p103 = por %p101, %p102
      %p104 = scmp.ne.s32.totalorder %s93, %s94
      %p105 = scmp.eq.s32.totalorder %s21, 0
      %p106 = por %p104, %p105
      %p107 = scmp.ne.s32.totalorder %s93, %s94
      %p108 = scmp.eq.s32.totalorder %s22, 1
      %p109 = por %p107, %p108
      %p111 = scmp.ne.s32.totalorder %s94, %s110
      %p112 = scmp.eq.s32.totalorder %s22, 0
      %p113 = por %p111, %p112
      %s114 = ssub.s32 %s23, %s35
      %s115 = ssub.s32 %s24, %s31
      %s116 = sor.u32 %s114, %s115
      %p117 = scmp.eq.s32.totalorder %s116, 0
      %s119 = sadd.s32 %s118, 1
      %s120 = scalar_select %p117, %s118, %s119
      %p123 = pneg %p117
      %p124 = scmp.eq.s32.totalorder %s16, 1
      %p125 = por %p123, %p124
      %p126 = scmp.ne.s32.totalorder %s118, %s121
      %p127 = scmp.eq.s32.totalorder %s16, 0
      %p128 = por %p126, %p127
      %p129 = scmp.ne.s32.totalorder %s118, %s121
      %p130 = scmp.eq.s32.totalorder %s21, 1
      %p131 = por %p129, %p130
      %p132 = scmp.ne.s32.totalorder %s121, %s122
      %p133 = scmp.eq.s32.totalorder %s21, 0
      %p134 = por %p132, %p133
      %p135 = scmp.ne.s32.totalorder %s121, %s122
      %p136 = scmp.eq.s32.totalorder %s22, 1
      %p137 = por %p135, %p136
      %p139 = scmp.ne.s32.totalorder %s122, %s138
      %p140 = scmp.eq.s32.totalorder %s22, 0
      %p141 = por %p139, %p140
      %p142 = scmp.le.s32.totalorder 1, %s16
      %p143 = scmp.lt.s32.totalorder %s16, 3
      %p144 = pnand %p142, %p143
      %p145 = pneg %p144
      // Predicated region
      $region9: #{tpu_custom_call.1} parent=5 // pred_check
        _
      $region10: #{tpu_custom_call.1} parent=5 // pred_check_branch
        %147 = sbr.rel (%p144) target = $region12
      $region11: #{tpu_custom_call.1} parent=5 // pred_region
        %s148 = ssub.s32 %s16, 1
        // Predicated region
        $region13: #{tpu_custom_call.1} parent=11 // pred_check
          %p149 = pneg %p80
        $region14: #{tpu_custom_call.1} parent=11 // pred_check_branch
          %151 = sbr.rel (%p149) target = $region16
        $region15: #{tpu_custom_call.1} parent=11 // pred_region
          %153 = vsyncadd [#allocation6], 0
          %s154 = smul.addr %s26, 8
          %s155 = scalar_lea.hbm %s1, %s154
          %s156 = sshll.u32 %s155, 4
          %s157 = int_to_ptr.hbm [resolvable:$true] %s156
          %s158 = sshll.u32 [#allocation5], 4
          %s159 = int_to_ptr.vmem [resolvable:$true] %s158
          %164 = dma.hbm_to_vmem [thread:$0]  %s157, 2048, %s159, [#allocation6], 128, 128, 8
        $region16: #{tpu_custom_call.1} parent=11 // pred_fallthru
          _
        // Predicated region
        $region17: #{tpu_custom_call.1} parent=11 // pred_check
          %p165 = pneg %p106
        $region18: #{tpu_custom_call.1} parent=11 // pred_check_branch
          %167 = sbr.rel (%p165) target = $region20
        $region19: #{tpu_custom_call.1} parent=11 // pred_region
          %p168 = scmp.lt.s32.totalorder %s26, 0
          %s169 = scalar_select %p168, %s26, 0
          %s170 = scalar_lea.vmem %s2, %s169
        $region20: #{tpu_custom_call.1} parent=11 // pred_fallthru
          _
      $region12: #{tpu_custom_call.1} parent=5 // pred_fallthru
        _
      %p171 = scmp.lt.s32.totalorder %s16, 2
      // Predicated region
      $region21: #{tpu_custom_call.1} parent=5 // pred_check
        %p172 = pneg %p171
      $region22: #{tpu_custom_call.1} parent=5 // pred_check_branch
        %174 = sbr.rel (%p172) target = $region24
      $region23: #{tpu_custom_call.1} parent=5 // pred_region
        // Predicated region
        $region25: #{tpu_custom_call.1} parent=23 // pred_check
          %p175 = pneg %p48
        $region26: #{tpu_custom_call.1} parent=23 // pred_check_branch
          %177 = sbr.rel (%p175) target = $region28
        $region27: #{tpu_custom_call.1} parent=23 // pred_region
          %s178 = sand.u32 %s38, 1
          %s179 = scalar_lea.sflag [#allocation3], %s178
          %s180 = sand.u32 %s38, 1
          %s181 = smul.addr %s180, 8
          %s182 = scalar_lea.vmem [#allocation2], %s181
          %184 = vsyncadd %s179, 0
          %s185 = smul.addr %s23, 8
          %s186 = scalar_lea.hbm %s0, %s185
          %s188 = sshll.u32 %s186, 4
          %s189 = int_to_ptr.hbm [resolvable:$true] %s188
          %s190 = sshll.u32 %s182, 4
          %s191 = int_to_ptr.vmem [resolvable:$true] %s190
          %193 = dma.hbm_to_vmem [thread:$0]  %s189, 128, %s191, %s179
        $region28: #{tpu_custom_call.1} parent=23 // pred_fallthru
          _
      $region24: #{tpu_custom_call.1} parent=5 // pred_fallthru
        _
      %p194 = scmp.le.s32.totalorder 1, %s16
      %p195 = scmp.lt.s32.totalorder %s16, 3
      %p196 = pnand %p194, %p195
      %p197 = pneg %p196
      // Predicated region
      $region29: #{tpu_custom_call.1} parent=5 // pred_check
        _
      $region30: #{tpu_custom_call.1} parent=5 // pred_check_branch
        %199 = sbr.rel (%p196) target = $region32
      $region31: #{tpu_custom_call.1} parent=5 // pred_region
        %s200 = ssub.s32 %s16, 1
        %s201 = sand.u32 %s41, 1
        %s202 = scalar_lea.sflag [#allocation3], %s201
        %s203 = sand.u32 %s41, 1
        %s204 = smul.addr %s203, 8
        %s205 = scalar_lea.vmem [#allocation2], %s204
        // Predicated region
        $region33: #{tpu_custom_call.1} parent=31 // pred_check
          %p206 = pneg %p54
        $region34: #{tpu_custom_call.1} parent=31 // pred_check_branch
          %208 = sbr.rel (%p206) target = $region36
        $region35: #{tpu_custom_call.1} parent=31 // pred_region
          %210 = dma.done %s202, 128
        $region36: #{tpu_custom_call.1} parent=31 // pred_fallthru
          _
        // Predicated region
        $region37: #{tpu_custom_call.1} parent=31 // pred_check
          %p211 = pneg %p80
        $region38: #{tpu_custom_call.1} parent=31 // pred_check_branch
          %213 = sbr.rel (%p211) target = $region40
        $region39: #{tpu_custom_call.1} parent=31 // pred_region
          %215 = dma.done [#allocation6], 2048
        $region40: #{tpu_custom_call.1} parent=31 // pred_fallthru
          _
        %s216 = sand.u32 %s41, 1
        %s217 = scalar_lea.sflag [#allocation3], %s216
        %s218 = sand.u32 %s41, 1
        %s219 = smul.addr %s218, 8
        %s220 = scalar_lea.vmem [#allocation2], %s219
        %p221 = pneg %p54
        %p222 = pneg %p51
        %p223 = pneg %p80
        %p224 = pneg %p77
        %p225 = scmp.lt.s32.totalorder %s26, 0
        %s226 = scalar_select %p225, %s26, 0
        %s227 = scalar_lea.vmem %s2, %s226
        %p228 = pneg %p106
        %p229 = pneg %p103
        %p230 = pneg %p134
        %p231 = pneg %p131
        %s232 = sand.u32 %s121, 1
        %s233 = scalar_lea.sflag [#allocation4], %s232
        %s234 = sand.u32 %s121, 1
        %s235 = smul.addr %s234, 8
        %s236 = scalar_lea.vmem [#allocation7], %s235
        %p237 = scmp.lt.s32.totalorder %s26, 0
        %s238 = scalar_select %p237, %s26, 0
        %s239 = scalar_lea.vmem %s2, %s238
        %v240 = vld [vmem:[%s205] sm:$0xff]
        %v241 = vld [vmem:[#allocation5] sm:$0xff]
        %v242 = vld [vmem:[#allocation5 + $0x8] sm:$0xff]
        %v243 = vld [vmem:[#allocation5 + $0x10] sm:$0xff]
        %v244 = vld [vmem:[#allocation5 + $0x18] sm:$0xff]
        %v245 = vld [vmem:[#allocation5 + $0x20] sm:$0xff]
        %v246 = vld [vmem:[#allocation5 + $0x28] sm:$0xff]
        %v247 = vld [vmem:[#allocation5 + $0x30] sm:$0xff]
        %v248 = vld [vmem:[#allocation5 + $0x38] sm:$0xff]
        %v249 = vld [vmem:[#allocation5 + $0x40] sm:$0xff]
        %v250 = vld [vmem:[#allocation5 + $0x48] sm:$0xff]
        %v251 = vld [vmem:[#allocation5 + $0x50] sm:$0xff]
        %v252 = vld [vmem:[#allocation5 + $0x58] sm:$0xff]
        %v253 = vld [vmem:[#allocation5 + $0x60] sm:$0xff]
        %v254 = vld [vmem:[#allocation5 + $0x68] sm:$0xff]
        %v255 = vld [vmem:[#allocation5 + $0x70] sm:$0xff]
        %v256 = vld [vmem:[#allocation5 + $0x78] sm:$0xff]
        %v257 = vld [vmem:[%s239] sm:$0x1]
        %v259 = vperm.slane %v257, 0
        %261 = vmatpush.msra.mxu0 %v256
        %262 = vmatpush.msra.mxu0 %v255
        %263 = vmatpush.msra.mxu0 %v254
        %264 = vmatpush.msra.mxu0 %v253
        %265 = vmatpush.msra.mxu0 %v252
        %266 = vmatpush.msra.mxu0 %v251
        %267 = vmatpush.msra.mxu0 %v250
        %268 = vmatpush.msra.mxu0 %v249
        %269 = vmatpush.msra.mxu0 %v248
        %270 = vmatpush.msra.mxu0 %v247
        %271 = vmatpush.msra.mxu0 %v246
        %272 = vmatpush.msra.mxu0 %v245
        %273 = vmatpush.msra.mxu0 %v244
        %274 = vmatpush.msra.mxu0 %v243
        %275 = vmatpush.msra.mxu0 %v242
        %276 = vmatpush.msra.mxu0 %v241
        %277 = vmatmul.f32.gmra.mxu0 %v240
        %v278 = vpop.f32.mrf.mxu0
        %v279 = vadd.f32 %v259, %v278
        %280 = vdwg.mxu0
        %281 = vst [vmem:[%s236] sm:$0xff] %v279
        %s282 = sand.u32 %s121, 1
        %s283 = scalar_lea.sflag [#allocation4], %s282
        %s284 = sand.u32 %s121, 1
        %s285 = smul.addr %s284, 8
        %s286 = scalar_lea.vmem [#allocation7], %s285
        // Predicated region
        $region41: #{tpu_custom_call.1} parent=31 // pred_check
          %p287 = pneg %p131
        $region42: #{tpu_custom_call.1} parent=31 // pred_check_branch
          %289 = sbr.rel (%p287) target = $region44
        $region43: #{tpu_custom_call.1} parent=31 // pred_region
          %291 = vsyncadd %s283, 0
          %s292 = sadd.s32 %s26, %s25
          %s293 = smul.addr %s292, 8
          %s294 = scalar_lea.hbm %s3, %s293
          %s296 = sshll.u32 %s286, 4
          %s297 = int_to_ptr.vmem [resolvable:$true] %s296
          %s298 = sshll.u32 %s294, 4
          %s299 = int_to_ptr.hbm [resolvable:$true] %s298
          %301 = dma.vmem_to_hbm [thread:$0]  %s297, 128, %s299, %s283
        $region44: #{tpu_custom_call.1} parent=31 // pred_fallthru
          _
      $region32: #{tpu_custom_call.1} parent=5 // pred_fallthru
        _
      %p302 = scmp.le.s32.totalorder 2, %s16
      // Predicated region
      $region45: #{tpu_custom_call.1} parent=5 // pred_check
        %p303 = pneg %p302
      $region46: #{tpu_custom_call.1} parent=5 // pred_check_branch
        %305 = sbr.rel (%p303) target = $region48
      $region47: #{tpu_custom_call.1} parent=5 // pred_region
        %s306 = ssub.s32 %s16, 2
        // Predicated region
        $region49: #{tpu_custom_call.1} parent=47 // pred_check
          %p307 = pneg %p137
        $region50: #{tpu_custom_call.1} parent=47 // pred_check_branch
          %309 = sbr.rel (%p307) target = $region52
        $region51: #{tpu_custom_call.1} parent=47 // pred_region
          %s310 = sand.u32 %s122, 1
          %s311 = scalar_lea.sflag [#allocation4], %s310
          %s312 = sand.u32 %s122, 1
          %s313 = smul.addr %s312, 8
          %s314 = scalar_lea.vmem [#allocation7], %s313
          %316 = dma.done %s311, 128
        $region52: #{tpu_custom_call.1} parent=47 // pred_fallthru
          _
      $region48: #{tpu_custom_call.1} parent=5 // pred_fallthru
        _
    $region6: #{tpu_custom_call.1} parent=1 // loop_footer
      %s20 = sadd.s32 1, %s16
    $region7: #{tpu_custom_call.1} parent=1 // loop_footer_branch
      %15 = sbr.rel target = $region3
    $region8: #{tpu_custom_call.1} parent=1 // loop_exit
      _
    %317 = vsyncpa [#allocation3], 1
    %s318 = scalar_lea.sflag [#allocation3], 1
    %319 = vsyncpa %s318, 1
    %320 = vsyncpa [#allocation6], 1
    %321 = vsyncpa [#allocation4], 1
    %s322 = scalar_lea.sflag [#allocation4], 1
    %323 = vsyncpa %s322, 1

</llo_original>
